<compile_context>
chip_gen: v6e
topology: v6e:2x2x1
jax: 0.10.0
libtpu: 0.0.40
codegen_flags: <defaults>
</compile_context>

<pallas_src>
import functools

import numpy as np
import jax
import jax.numpy as jnp
from jax.experimental import pallas as pl
from jax.experimental.pallas import tpu as pltpu

DIM = 32
NUM_HEADS = 4
HEAD_DIM = DIM // NUM_HEADS
SEQ = 8
BATCH = 2


# ----------------------------------- kernel -----------------------------------
def _lin_mha_kernel(x_ref, wqkv_ref, bqkv_ref, wo_ref, bo_ref, hsel_ref, mask_ref,
                    o_ref):
    n_tok, dim = x_ref.shape            # (B*S, D)
    hn = hsel_ref.shape[0]              # H * n_tok  (block-diagonal K/V rows)
    num_heads = hn // n_tok

    x = x_ref[...]                                                      # (N, D)

    # Fused QKV projection: one MXU matmul against the pre-transposed weight.
    qkv = (jnp.dot(x, wqkv_ref[...], preferred_element_type=jnp.float32)
           + bqkv_ref[...])                                             # (N, 3D)
    q_raw = qkv[:, :dim]
    k_raw = qkv[:, dim:2 * dim]
    v = qkv[:, 2 * dim:]

    # exp feature maps.  Per-row shift on q (lane-only reduce) and a single global
    # scalar shift on k — both cancel exactly in num/den, so correctness holds.
    q = jnp.exp(q_raw - jnp.max(q_raw, axis=-1, keepdims=True))         # (N, D)
    k = jnp.exp(k_raw - jnp.max(k_raw, axis=(0, 1), keepdims=True))     # (N, D)

    # Block-diagonal (per-head) K/V layout: row r = h*N + s holds k[s,:] (resp.
    # v[s,:]) restricted to head h's feature slice.  hsel is a precomputed input.
    hsel = hsel_ref[...]                                                # (HN, D)
    kblk = jnp.concatenate([k] * num_heads, axis=0) * hsel              # (HN, D)
    # [Vblk | head-indicator]: one matmul yields numerator AND denominator, with
    # the denominator already broadcast across each head's lanes.
    w2 = jnp.concatenate(
        [jnp.concatenate([v] * num_heads, axis=0) * hsel, hsel], axis=1)  # (HN, 2D)

    # Per-head scores for all heads at once (NT contraction, MXU-native; no
    # transpose is materialized — same pattern as the TPU flash-attention kernel).
    scores = jax.lax.dot_general(q, kblk, (((1,), (1,)), ((), ())),
                                 preferred_element_type=jnp.float32)    # (N, HN)

    # Causal + same-batch mask (precomputed input), applied as a select.
    scores = jnp.where(mask_ref[...] != 0.0, scores, 0.0)

    numden = jnp.dot(scores, w2, preferred_element_type=jnp.float32)    # (N, 2D)
    den = numden[:, dim:]
    # EUP reciprocal seed (idle slot) + one free VPU Newton step -> f32 accurate.
    r = pl.reciprocal(den, approx=True)
    r = r * (2.0 - den * r)
    attn = numden[:, :dim] * r                                          # (N, D)

    out = (jnp.dot(attn, wo_ref[...], preferred_element_type=jnp.float32)
           + bo_ref[...])
    o_ref[...] = out.astype(o_ref.dtype)


# ------------------------- one-time (init-side) packing -------------------------
def pack_params(params, batch, seq_len, num_heads):
    """Done ONCE at parameter-load time — nothing here runs per forward call."""
    dim = params["wq"].shape[0]
    head_dim = dim // num_heads
    n_tok = batch * seq_len
    hn = num_heads * n_tok

    # Fuse Q/K/V into a single pre-transposed (D, 3D) weight (PyTorch stores
    # (out, in); the kernel never transposes a weight).
    wqkv = jnp.concatenate([params["wq"].T, params["wk"].T, params["wv"].T], axis=1)
    bqkv = jnp.concatenate([params["bq"], params["bk"], params["bv"]], axis=1)
    wo_t = params["wo"].T
    bo = params["bo"]

    # Head indicator: hsel[h*n_tok + s, d] = 1 iff feature d belongs to head h.
    r = np.arange(hn)[:, None]
    d = np.arange(dim)[None, :]
    hsel = ((d // head_dim) == (r // n_tok)).astype(np.float32)          # (HN, D)

    # Causal + same-batch mask over (query token t, block column h*n_tok + s).
    t = np.arange(n_tok)[:, None]
    c = np.arange(hn)[None, :]
    s = c % n_tok
    mask = ((s <= t) & ((s // seq_len) == (t // seq_len))).astype(np.float32)

    return dict(wqkv=wqkv, bqkv=bqkv, wo_t=wo_t, bo=bo,
                hsel=jnp.asarray(hsel), mask=jnp.asarray(mask))


# ----------------------------------- forward -----------------------------------
@jax.jit
def linear_multihead_attention(x, packed):
    """x: (B, S, D) float32.  packed: output of pack_params (init-time constants)."""
    B, S, D = x.shape
    n_tok = B * S
    hn = packed["hsel"].shape[0]

    # Advisory cost hint for XLA's scheduler (three attention matmuls + 2 projs).
    flops = (2 * n_tok * D * (3 * D)      # fused QKV projection
             + 2 * n_tok * D * hn         # scores
             + 2 * n_tok * hn * (2 * D)   # numerator | denominator
             + 2 * n_tok * D * D)         # output projection
    transcendentals = 3 * n_tok * D       # exp(q), exp(k), reciprocal
    bytes_accessed = 4 * (n_tok * D * 2 + packed["wqkv"].size + packed["bqkv"].size
                          + packed["wo_t"].size + packed["bo"].size
                          + packed["hsel"].size + packed["mask"].size)

    vmem = pl.BlockSpec(memory_space=pltpu.MemorySpace.VMEM)
    out2d = pl.pallas_call(
        _lin_mha_kernel,
        out_shape=jax.ShapeDtypeStruct((n_tok, D), x.dtype),
        in_specs=[vmem] * 7,
        out_specs=vmem,
        cost_estimate=pl.CostEstimate(flops=flops,
                                      transcendentals=transcendentals,
                                      bytes_accessed=bytes_accessed),
    )(x.reshape(n_tok, D), packed["wqkv"], packed["bqkv"], packed["wo_t"],
      packed["bo"], packed["hsel"], packed["mask"])
    return out2d.reshape(B, S, D)
    # TODO(synk): rope branch (rotary embeddings) and the causal=False path are not
    # implemented; this kernel covers the default forward (rope=None, causal=True).


# ------------------------- parameter init (deterministic) -------------------------
def init_params(key, dim):
    ks = jax.random.split(key, 7)
    xavier_bound = (6.0 / (dim + dim)) ** 0.5          # xavier_uniform_
    linear_bias_bound = 1.0 / (dim ** 0.5)             # default nn.Linear bias init

    def xavier(k):
        return jax.random.uniform(k, (dim, dim), jnp.float32,
                                  -xavier_bound, xavier_bound)

    def bias(k):
        return jax.random.uniform(k, (1, dim), jnp.float32,
                                  -linear_bias_bound, linear_bias_bound)

    return dict(
        wq=xavier(ks[0]), bq=bias(ks[1]),
        wk=xavier(ks[2]), bk=bias(ks[3]),
        wv=xavier(ks[4]), bv=bias(ks[5]),
        wo=xavier(ks[6]), bo=jnp.zeros((1, dim), jnp.float32),  # out_proj bias = 0
    )


# ------------------------- pure-JAX reference (cumsum form) -------------------------
def reference(x, p):
    B, S, D = x.shape
    H, hd = NUM_HEADS, HEAD_DIM
    q = x @ p["wq"].T + p["bq"]
    k = x @ p["wk"].T + p["bk"]
    v = x @ p["wv"].T + p["bv"]

    # 'b s (h d) -> (b h) s d'
    def split(t):
        return t.reshape(B, S, H, hd).transpose(0, 2, 1, 3).reshape(B * H, S, hd)

    q, k, v = jnp.exp(split(q)), jnp.exp(split(k)), split(v)
    kv = jnp.cumsum(jnp.einsum("zsD,zsd->zsDd", k, v), axis=1)   # (Z,S,hd,hd)
    k1 = jnp.cumsum(k, axis=1)                                   # (Z,S,hd)
    out = jnp.einsum("zsD,zsDd->zsd", q, kv) / jnp.sum(q * k1, -1, keepdims=True)
    # '(b h) s d -> b s (h d)'
    out = out.reshape(B, H, S, hd).transpose(0, 2, 1, 3).reshape(B, S, D)
    return out @ p["wo"].T + p["bo"]


if __name__ == "__main__":
    key = jax.random.PRNGKey(0)
    kx, kp = jax.random.split(key)
    x = jax.random.normal(kx, (BATCH, SEQ, DIM), jnp.float32)
    params = init_params(kp, DIM)
    packed = pack_params(params, BATCH, SEQ, NUM_HEADS)   # one-time, init-side

    out = jax.block_until_ready(linear_multihead_attention(x, packed))
    ref = reference(x, params)

    assert out.shape == (BATCH, SEQ, DIM)
    err = float(jnp.max(jnp.abs(out - ref)))
    # Newton-refined EUP reciprocal keeps the original 1e-4 contract.
    assert jnp.allclose(out, ref, atol=1e-4, rtol=1e-4), err
    print("KERNEL_OK")
</pallas_src>

<mosaic_0001>
module attributes {stable_mosaic.version = 11 : i64} {
  func.func @_lin_mha_kernel(%arg0: memref<16x32xf32, #tpu.memory_space<vmem>>, %arg1: memref<32x96xf32, #tpu.memory_space<vmem>>, %arg2: memref<1x96xf32, #tpu.memory_space<vmem>>, %arg3: memref<32x32xf32, #tpu.memory_space<vmem>>, %arg4: memref<1x32xf32, #tpu.memory_space<vmem>>, %arg5: memref<64x32xf32, #tpu.memory_space<vmem>>, %arg6: memref<16x64xf32, #tpu.memory_space<vmem>>, %arg7: memref<16x32xf32, #tpu.memory_space<vmem>>) attributes {dimension_semantics = [], scalar_prefetch = 0 : i64, scratch_operands = 0 : i64, tpu.core_type = #tpu.core_type<tc>} {
    %c0 = arith.constant 0 : index
    %c0_0 = arith.constant 0 : index
    %0 = vector.load %arg0[%c0, %c0_0] : memref<16x32xf32, #tpu.memory_space<vmem>>, vector<16x32xf32>
    %c0_1 = arith.constant 0 : index
    %c0_2 = arith.constant 0 : index
    %1 = vector.load %arg1[%c0_1, %c0_2] : memref<32x96xf32, #tpu.memory_space<vmem>>, vector<32x96xf32>
    %cst = arith.constant dense<0.000000e+00> : vector<16x96xf32>
    %2 = tpu.matmul %0, %1, %cst {dimension_numbers = #tpu.dot_dimension_numbers<[1], [0], [0], [1], [0, 0, 1, 1], [], []>} : vector<16x32xf32>, vector<32x96xf32>, vector<16x96xf32> -> vector<16x96xf32>
    %c0_3 = arith.constant 0 : index
    %c0_4 = arith.constant 0 : index
    %3 = vector.load %arg2[%c0_3, %c0_4] : memref<1x96xf32, #tpu.memory_space<vmem>>, vector<1x96xf32>
    %4 = vector.broadcast %3 : vector<1x96xf32> to vector<16x96xf32>
    %5 = arith.addf %2, %4 : vector<16x96xf32>
    %6 = vector.extract_strided_slice %5 {offsets = [0, 0], sizes = [16, 32], strides = [1, 1]} : vector<16x96xf32> to vector<16x32xf32>
    %7 = vector.extract_strided_slice %5 {offsets = [0, 32], sizes = [16, 32], strides = [1, 1]} : vector<16x96xf32> to vector<16x32xf32>
    %8 = vector.extract_strided_slice %5 {offsets = [0, 64], sizes = [16, 32], strides = [1, 1]} : vector<16x96xf32> to vector<16x32xf32>
    %cst_5 = arith.constant dense<0xFF800000> : vector<16xf32>
    %9 = vector.multi_reduction <maximumf>, %6, %cst_5 [1] : vector<16x32xf32> to vector<16xf32>
    %10 = vector.shape_cast %9 : vector<16xf32> to vector<16x1xf32>
    %11 = vector.broadcast %10 : vector<16x1xf32> to vector<16x32xf32>
    %12 = arith.subf %6, %11 : vector<16x32xf32>
    %13 = math.exp %12 : vector<16x32xf32>
    %14 = vector.shape_cast %7 : vector<16x32xf32> to vector<1x16x32xf32>
    %cst_6 = arith.constant dense<0xFF800000> : vector<1xf32>
    %15 = vector.multi_reduction <maximumf>, %14, %cst_6 [1, 2] : vector<1x16x32xf32> to vector<1xf32>
    %16 = vector.shape_cast %15 : vector<1xf32> to vector<1x1x1xf32>
    %17 = vector.extract %16[0, 0, 0] : f32 from vector<1x1x1xf32>
    %18 = vector.broadcast %17 : f32 to vector<1x1xf32>
    %19 = vector.broadcast %18 : vector<1x1xf32> to vector<16x32xf32>
    %20 = arith.subf %7, %19 : vector<16x32xf32>
    %21 = math.exp %20 : vector<16x32xf32>
    %c0_7 = arith.constant 0 : index
    %c0_8 = arith.constant 0 : index
    %22 = vector.load %arg5[%c0_7, %c0_8] : memref<64x32xf32, #tpu.memory_space<vmem>>, vector<64x32xf32>
    %23 = tpu.concatenate %21, %21, %21, %21 in 0 : vector<16x32xf32>, vector<16x32xf32>, vector<16x32xf32>, vector<16x32xf32> -> vector<64x32xf32>
    %24 = arith.mulf %23, %22 : vector<64x32xf32>
    %25 = tpu.concatenate %8, %8, %8, %8 in 0 : vector<16x32xf32>, vector<16x32xf32>, vector<16x32xf32>, vector<16x32xf32> -> vector<64x32xf32>
    %26 = arith.mulf %25, %22 : vector<64x32xf32>
    %27 = tpu.concatenate %26, %22 in 1 : vector<64x32xf32>, vector<64x32xf32> -> vector<64x64xf32>
    %cst_9 = arith.constant dense<0.000000e+00> : vector<16x64xf32>
    %28 = tpu.matmul %13, %24, %cst_9 {dimension_numbers = #tpu.dot_dimension_numbers<[1], [1], [0], [0], [0, 0, 1, 0], [], []>} : vector<16x32xf32>, vector<64x32xf32>, vector<16x64xf32> -> vector<16x64xf32>
    %c0_10 = arith.constant 0 : index
    %c0_11 = arith.constant 0 : index
    %29 = vector.load %arg6[%c0_10, %c0_11] : memref<16x64xf32, #tpu.memory_space<vmem>>, vector<16x64xf32>
    %cst_12 = arith.constant 0.000000e+00 : f32
    %30 = vector.broadcast %cst_12 : f32 to vector<16x64xf32>
    %31 = arith.cmpf one, %29, %30 : vector<16x64xf32>
    %cst_13 = arith.constant 0.000000e+00 : f32
    %32 = vector.broadcast %cst_13 : f32 to vector<16x64xf32>
    %33 = arith.select %31, %28, %32 : vector<16x64xi1>, vector<16x64xf32>
    %cst_14 = arith.constant dense<0.000000e+00> : vector<16x64xf32>
    %34 = tpu.matmul %33, %27, %cst_14 {dimension_numbers = #tpu.dot_dimension_numbers<[1], [0], [0], [1], [0, 0, 1, 1], [], []>} : vector<16x64xf32>, vector<64x64xf32>, vector<16x64xf32> -> vector<16x64xf32>
    %35 = vector.extract_strided_slice %34 {offsets = [0, 32], sizes = [16, 32], strides = [1, 1]} : vector<16x64xf32> to vector<16x32xf32>
    %36 = tpu.reciprocal %35 {approx = true} : vector<16x32xf32> -> vector<16x32xf32>
    %37 = arith.mulf %35, %36 : vector<16x32xf32>
    %cst_15 = arith.constant 2.000000e+00 : f32
    %38 = vector.broadcast %cst_15 : f32 to vector<16x32xf32>
    %39 = arith.subf %38, %37 : vector<16x32xf32>
    %40 = arith.mulf %36, %39 : vector<16x32xf32>
    %41 = vector.extract_strided_slice %34 {offsets = [0, 0], sizes = [16, 32], strides = [1, 1]} : vector<16x64xf32> to vector<16x32xf32>
    %42 = arith.mulf %41, %40 : vector<16x32xf32>
    %c0_16 = arith.constant 0 : index
    %c0_17 = arith.constant 0 : index
    %43 = vector.load %arg3[%c0_16, %c0_17] : memref<32x32xf32, #tpu.memory_space<vmem>>, vector<32x32xf32>
    %cst_18 = arith.constant dense<0.000000e+00> : vector<16x32xf32>
    %44 = tpu.matmul %42, %43, %cst_18 {dimension_numbers = #tpu.dot_dimension_numbers<[1], [0], [0], [1], [0, 0, 1, 1], [], []>} : vector<16x32xf32>, vector<32x32xf32>, vector<16x32xf32> -> vector<16x32xf32>
    %c0_19 = arith.constant 0 : index
    %c0_20 = arith.constant 0 : index
    %45 = vector.load %arg4[%c0_19, %c0_20] : memref<1x32xf32, #tpu.memory_space<vmem>>, vector<1x32xf32>
    %46 = vector.broadcast %45 : vector<1x32xf32> to vector<16x32xf32>
    %47 = arith.addf %44, %46 : vector<16x32xf32>
    %c0_21 = arith.constant 0 : index
    %c0_22 = arith.constant 0 : index
    %48 = vector.load %arg7[%c0_21, %c0_22] : memref<16x32xf32, #tpu.memory_space<vmem>>, vector<16x32xf32>
    tpu.vector_store %arg7[%c0_21, %c0_22], %47 {strides = array<i32>} : memref<16x32xf32, #tpu.memory_space<vmem>>, vector<16x32xf32>,
    return
  }
}

</mosaic_0001>

<llo_original>
// kernel: linear_multihead_attention.1
$region0: #{linear_multihead_attention.1}
  #allocation0 [shape = 'u32[]', space=smem, size = 0x4, offset = 0x4, fixed_abs, tag = 'smem constant byte address 0x4 - core index']
  #allocation1 [shape = 'u32[144,128]{1,0:T(1,128)}', space=vmem, size = 0x12000, scoped, tag = 'internal scratch']
  %s0 = inlined_call_operand.vmem [shape: f32[16,32], index: 0, kind: input, shape index: {}]
  %s1 = inlined_call_operand.vmem [shape: f32[32,96], index: 1, kind: input, shape index: {}]
  %s2 = inlined_call_operand.vmem [shape: f32[1,96], index: 2, kind: input, shape index: {}]
  %s3 = inlined_call_operand.vmem [shape: f32[32,32], index: 3, kind: input, shape index: {}]
  %s4 = inlined_call_operand.vmem [shape: f32[1,32], index: 4, kind: input, shape index: {}]
  %s5 = inlined_call_operand.vmem [shape: f32[64,32], index: 5, kind: input, shape index: {}]
  %s6 = inlined_call_operand.vmem [shape: f32[16,64], index: 6, kind: input, shape index: {}]
  %s7 = inlined_call_operand.hbm [shape: f32[16,32], index: 7, kind: output, shape index: {}]
  %s8 = sld [smem:[#allocation0]]
  $region38: #{linear_multihead_attention.1} parent=0
    _
  %s10 = ssub.s32 1, %s8
  %s11 = scalar_select 0, %s10, %s8
  $region1: #{linear_multihead_attention.1} parent=0
    #allocation2 [shape = 'u8[8192]{0}', space=vmem, size = 0x2000, scoped, tag = 'output window, operand 0, single buffered']
    #allocation3 [shape = 's32[1]{0}', space=sflag, size = 0x4, scoped, tag = 'scoped memory for linear_multihead_attention.1']
    %12 = vsyncpa [#allocation3], 0
    // Predicated region
    $region2: #{linear_multihead_attention.1} parent=1 // pred_check
      _
    $region3: #{linear_multihead_attention.1} parent=1 // pred_check_branch
      %14 = sbr.rel (0) target = $region5
    $region4: #{linear_multihead_attention.1} parent=1 // pred_region
      _
    $region5: #{linear_multihead_attention.1} parent=1 // pred_fallthru
      _
    // Predicated region
    $region6: #{linear_multihead_attention.1} parent=1 // pred_check
      _
    $region7: #{linear_multihead_attention.1} parent=1 // pred_check_branch
      %16 = sbr.rel (0) target = $region9
    $region8: #{linear_multihead_attention.1} parent=1 // pred_region
      _
    $region9: #{linear_multihead_attention.1} parent=1 // pred_fallthru
      _
    // Predicated region
    $region10: #{linear_multihead_attention.1} parent=1 // pred_check
      _
    $region11: #{linear_multihead_attention.1} parent=1 // pred_check_branch
      %18 = sbr.rel (0) target = $region13
    $region12: #{linear_multihead_attention.1} parent=1 // pred_region
      _
    $region13: #{linear_multihead_attention.1} parent=1 // pred_fallthru
      _
    // Predicated region
    $region14: #{linear_multihead_attention.1} parent=1 // pred_check
      _
    $region15: #{linear_multihead_attention.1} parent=1 // pred_check_branch
      %20 = sbr.rel (0) target = $region17
    $region16: #{linear_multihead_attention.1} parent=1 // pred_region
      _
    $region17: #{linear_multihead_attention.1} parent=1 // pred_fallthru
      _
    // Predicated region
    $region18: #{linear_multihead_attention.1} parent=1 // pred_check
      _
    $region19: #{linear_multihead_attention.1} parent=1 // pred_check_branch
      %22 = sbr.rel (0) target = $region21
    $region20: #{linear_multihead_attention.1} parent=1 // pred_region
      _
    $region21: #{linear_multihead_attention.1} parent=1 // pred_fallthru
      _
    // Predicated region
    $region22: #{linear_multihead_attention.1} parent=1 // pred_check
      _
    $region23: #{linear_multihead_attention.1} parent=1 // pred_check_branch
      %24 = sbr.rel (0) target = $region25
    $region24: #{linear_multihead_attention.1} parent=1 // pred_region
      _
    $region25: #{linear_multihead_attention.1} parent=1 // pred_fallthru
      _
    // Predicated region
    $region26: #{linear_multihead_attention.1} parent=1 // pred_check
      _
    $region27: #{linear_multihead_attention.1} parent=1 // pred_check_branch
      %26 = sbr.rel (0) target = $region29
    $region28: #{linear_multihead_attention.1} parent=1 // pred_region
      _
    $region29: #{linear_multihead_attention.1} parent=1 // pred_fallthru
      _
    %v27 = vld [vmem:[%s0] sm:$0xff]
    %v28 = vld [vmem:[%s0 + $0x8] sm:$0xff]
    %v29 = vld [vmem:[%s1] sm:$0xff]
    %v30 = vld [vmem:[%s1 + $0x8] sm:$0xff]
    %v31 = vld [vmem:[%s1 + $0x10] sm:$0xff]
    %v32 = vld [vmem:[%s1 + $0x18] sm:$0xff]
    %v33 = vld [vmem:[%s2] sm:$0x1]
    %v35 = vlaneseq
    %v36 = vshrl.u32 %v35, 7
    %v37 = vsub.s32 0, %v36
    %v38 = vrot.slane %v33, %v37
    %vm40 = vcmask 261120
    %v42 = vsel %vm40, %v27, 0
    %v45 = vsel %vm40, %v28, 0
    %47 = vmatprep.subr.mxu0 0.0
    %48 = vmatpush1.msra.mxu0 0.0
    %49 = vmatprep.subr.mxu0 0.0
    %50 = vmatpush1.msra.mxu0 0.0
    %51 = vmatprep.subr.mxu0 0.0
    %52 = vmatpush1.msra.mxu0 0.0
    %53 = vmatprep.subr.mxu0 0.0
    %54 = vmatpush1.msra.mxu0 0.0
    %55 = vmatprep.subr.mxu0 0.0
    %56 = vmatpush1.msra.mxu0 0.0
    %57 = vmatprep.subr.mxu0 0.0
    %58 = vmatpush1.msra.mxu0 0.0
    %59 = vmatprep.subr.mxu0 0.0
    %60 = vmatpush1.msra.mxu0 0.0
    %61 = vmatprep.subr.mxu0 0.0
    %62 = vmatpush1.msra.mxu0 0.0
    %63 = vmatprep.subr.mxu0 0.0
    %64 = vmatpush1.msra.mxu0 0.0
    %65 = vmatprep.subr.mxu0 0.0
    %66 = vmatpush1.msra.mxu0 0.0
    %67 = vmatprep.subr.mxu0 0.0
    %68 = vmatpush1.msra.mxu0 0.0
    %69 = vmatprep.subr.mxu0 0.0
    %70 = vmatpush1.msra.mxu0 0.0
    %71 = vmatprep.subr.mxu0 0.0
    %72 = vmatpush1.msra.mxu0 %v32
    %73 = vmatprep.subr.mxu0 0.0
    %74 = vmatpush1.msra.mxu0 %v31
    %75 = vmatprep.subr.mxu0 0.0
    %76 = vmatpush1.msra.mxu0 %v30
    %77 = vmatprep.subr.mxu0 0.0
    %78 = vmatpush1.msra.mxu0 %v29
    %79 = vmatprep.subr.mxu0 0.0
    %80 = vmatpush2.msra.mxu0 0.0
    %81 = vmatprep.subr.mxu0 0.0
    %82 = vmatpush2.msra.mxu0 0.0
    %83 = vmatprep.subr.mxu0 0.0
    %84 = vmatpush2.msra.mxu0 0.0
    %85 = vmatprep.subr.mxu0 0.0
    %86 = vmatpush2.msra.mxu0 0.0
    %87 = vmatprep.subr.mxu0 0.0
    %88 = vmatpush2.msra.mxu0 0.0
    %89 = vmatprep.subr.mxu0 0.0
    %90 = vmatpush2.msra.mxu0 0.0
    %91 = vmatprep.subr.mxu0 0.0
    %92 = vmatpush2.msra.mxu0 0.0
    %93 = vmatprep.subr.mxu0 0.0
    %94 = vmatpush2.msra.mxu0 0.0
    %95 = vmatprep.subr.mxu0 0.0
    %96 = vmatpush2.msra.mxu0 0.0
    %97 = vmatprep.subr.mxu0 0.0
    %98 = vmatpush2.msra.mxu0 0.0
    %99 = vmatprep.subr.mxu0 0.0
    %100 = vmatpush2.msra.mxu0 0.0
    %101 = vmatprep.subr.mxu0 0.0
    %102 = vmatpush2.msra.mxu0 0.0
    %103 = vmatprep.subr.mxu0 0.0
    %104 = vmatpush2.msra.mxu0 0.0
    %105 = vmatprep.subr.mxu0 0.0
    %106 = vmatpush2.msra.mxu0 0.0
    %107 = vmatprep.subr.mxu0 0.0
    %108 = vmatpush2.msra.mxu0 0.0
    %109 = vmatprep.subr.mxu0 0.0
    %110 = vmatpush2.msra.mxu0 0.0
    %111 = vmatprep.mubr.f32.mxu0 0.0
    %112 = vmatmul.mubr.f32.gmra.mxu0 %v42
    %v113 = vpop.f32.mrf.mxu0
    %v114 = vadd.f32 %v38, %v113
    %v115 = vpop.f32.mrf.mxu0
    %116 = vmatprep.mubr.f32.mxu0 0.0
    %117 = vmatmul.mubr.f32.gmra.mxu0 %v45
    %v118 = vpop.f32.mrf.mxu0
    %v119 = vadd.f32 %v38, %v118
    %v120 = vpop.f32.mrf.mxu0
    %121 = vdwg.mxu0
    %v122 = vsel %vm40, %v114, -inf
    %123 = vmax.xlane.f32.xlu0 %v122
    %v124 = vpop.xlane.xlu0 %123
    %v125 = vsel %vm40, %v119, -inf
    %126 = vmax.xlane.f32.xlu0 %v125
    %v127 = vpop.xlane.xlu0 %126
    %v128 = vsub.f32 %v114, %v124
    %v129 = vsub.f32 %v119, %v127
    %v130 = vmul.f32 %v128, 1.442695
    %v131 = vpow.pop %v130
    %v132 = vmul.f32 %v129, 1.442695
    %v133 = vpow.pop %v132
    %vm134 = vcmask 523520
    %v135 = vsel %vm134, %v114, -inf
    %v136 = vsel %vm134, %v119, -inf
    %v137 = vmax.f32 %v135, %v136
    %138 = vmax.xlane.f32.xlu0 %v137
    %v139 = vpop.xlane.xlu0 %138
    %v140 = vrot.slane %v139, 4
    %v141 = vmax.f32 %v139, %v140
    %v142 = vrot.slane %v141, 2
    %v143 = vmax.f32 %v141, %v142
    %v144 = vrot.slane %v143, 1
    %v145 = vmax.f32 %v143, %v144
    %s146 = vtos %v145
    %v147 = vstv %s146
    %v148 = vsub.f32 %v114, %v147
    %v149 = vsub.f32 %v119, %v147
    %v150 = vmul.f32 %v148, 1.442695
    %v151 = vpow.pop %v150
    %v152 = vmul.f32 %v149, 1.442695
    %v153 = vpow.pop %v152
    %v154 = vld [vmem:[%s5] sm:$0xff]
    %v155 = vld [vmem:[%s5 + $0x8] sm:$0xff]
    %v156 = vld [vmem:[%s5 + $0x10] sm:$0xff]
    %v157 = vld [vmem:[%s5 + $0x18] sm:$0xff]
    %v158 = vld [vmem:[%s5 + $0x20] sm:$0xff]
    %v159 = vld [vmem:[%s5 + $0x28] sm:$0xff]
    %v160 = vld [vmem:[%s5 + $0x30] sm:$0xff]
    %v161 = vld [vmem:[%s5 + $0x38] sm:$0xff]
    %170 = vrot.lane.b32.xlu0 %v154, 32
    %v171 = vpop.permute.xlu0 %170
    %172 = vrot.lane.b32.xlu0 %v155, 32
    %v173 = vpop.permute.xlu0 %172
    %174 = vrot.lane.b32.xlu0 %v156, 32
    %v175 = vpop.permute.xlu0 %174
    %176 = vrot.lane.b32.xlu0 %v157, 32
    %v177 = vpop.permute.xlu0 %176
    %178 = vrot.lane.b32.xlu0 %v158, 32
    %v179 = vpop.permute.xlu0 %178
    %180 = vrot.lane.b32.xlu0 %v159, 32
    %v181 = vpop.permute.xlu0 %180
    %182 = vrot.lane.b32.xlu0 %v160, 32
    %v183 = vpop.permute.xlu0 %182
    %184 = vrot.lane.b32.xlu0 %v161, 32
    %v185 = vpop.permute.xlu0 %184
    %v194 = vmul.f32 %v151, %v171
    %v195 = vmul.f32 %v153, %v173
    %v196 = vmul.f32 %v151, %v175
    %v197 = vmul.f32 %v153, %v177
    %v198 = vmul.f32 %v151, %v179
    %v199 = vmul.f32 %v153, %v181
    %v200 = vmul.f32 %v151, %v183
    %v201 = vmul.f32 %v153, %v185
    %202 = vrot.lane.b32.xlu0 %v154, 64
    %v203 = vpop.permute.xlu0 %202
    %204 = vrot.lane.b32.xlu0 %v155, 64
    %v205 = vpop.permute.xlu0 %204
    %206 = vrot.lane.b32.xlu0 %v156, 64
    %v207 = vpop.permute.xlu0 %206
    %208 = vrot.lane.b32.xlu0 %v157, 64
    %v209 = vpop.permute.xlu0 %208
    %210 = vrot.lane.b32.xlu0 %v158, 64
    %v211 = vpop.permute.xlu0 %210
    %212 = vrot.lane.b32.xlu0 %v159, 64
    %v213 = vpop.permute.xlu0 %212
    %214 = vrot.lane.b32.xlu0 %v160, 64
    %v215 = vpop.permute.xlu0 %214
    %216 = vrot.lane.b32.xlu0 %v161, 64
    %v217 = vpop.permute.xlu0 %216
    %v226 = vmul.f32 %v114, %v203
    %v227 = vmul.f32 %v119, %v205
    %v228 = vmul.f32 %v114, %v207
    %v229 = vmul.f32 %v119, %v209
    %v230 = vmul.f32 %v114, %v211
    %v231 = vmul.f32 %v119, %v213
    %v232 = vmul.f32 %v114, %v215
    %v233 = vmul.f32 %v119, %v217
    %242 = vrot.lane.b32.xlu0 %v226, 64
    %v243 = vpop.permute.xlu0 %242
    %244 = vrot.lane.b32.xlu0 %v227, 64
    %v245 = vpop.permute.xlu0 %244
    %246 = vrot.lane.b32.xlu0 %v228, 64
    %v247 = vpop.permute.xlu0 %246
    %248 = vrot.lane.b32.xlu0 %v229, 64
    %v249 = vpop.permute.xlu0 %248
    %250 = vrot.lane.b32.xlu0 %v230, 64
    %v251 = vpop.permute.xlu0 %250
    %252 = vrot.lane.b32.xlu0 %v231, 64
    %v253 = vpop.permute.xlu0 %252
    %254 = vrot.lane.b32.xlu0 %v232, 64
    %v255 = vpop.permute.xlu0 %254
    %256 = vrot.lane.b32.xlu0 %v233, 64
    %v257 = vpop.permute.xlu0 %256
    %v266 = vsel %vm40, %v243, %v171
    %v267 = vsel %vm40, %v245, %v173
    %v268 = vsel %vm40, %v247, %v175
    %v269 = vsel %vm40, %v249, %v177
    %v270 = vsel %vm40, %v251, %v179
    %v271 = vsel %vm40, %v253, %v181
    %v272 = vsel %vm40, %v255, %v183
    %v273 = vsel %vm40, %v257, %v185
    %282 = vrot.lane.b32.xlu0 %v194, 96
    %v283 = vpop.permute.xlu0 %282
    %284 = vrot.lane.b32.xlu0 %v195, 96
    %v285 = vpop.permute.xlu0 %284
    %286 = vrot.lane.b32.xlu0 %v196, 96
    %v287 = vpop.permute.xlu0 %286
    %288 = vrot.lane.b32.xlu0 %v197, 96
    %v289 = vpop.permute.xlu0 %288
    %290 = vrot.lane.b32.xlu0 %v198, 96
    %v291 = vpop.permute.xlu0 %290
    %292 = vrot.lane.b32.xlu0 %v199, 96
    %v293 = vpop.permute.xlu0 %292
    %294 = vrot.lane.b32.xlu0 %v200, 96
    %v295 = vpop.permute.xlu0 %294
    %296 = vrot.lane.b32.xlu0 %v201, 96
    %v297 = vpop.permute.xlu0 %296
    %v299 = vsel %vm40, %v131, 0
    %v302 = vsel %vm40, %v133, 0
    %v304 = vsel %vm40, %v283, 0
    %v306 = vsel %vm40, %v285, 0
    %v308 = vsel %vm40, %v287, 0
    %v310 = vsel %vm40, %v289, 0
    %v312 = vsel %vm40, %v291, 0
    %v314 = vsel %vm40, %v293, 0
    %v316 = vsel %vm40, %v295, 0
    %v318 = vsel %vm40, %v297, 0
    %320 = vmatprep.subr.mxu0 0.0
    %321 = vmatpush1.xpose.msra.mxu0 0.0
    %322 = vmatprep.subr.mxu0 0.0
    %323 = vmatpush1.xpose.msra.mxu0 0.0
    %324 = vmatprep.subr.mxu0 0.0
    %325 = vmatpush1.xpose.msra.mxu0 0.0
    %326 = vmatprep.subr.mxu0 0.0
    %327 = vmatpush1.xpose.msra.mxu0 0.0
    %328 = vmatprep.subr.mxu0 0.0
    %329 = vmatpush1.xpose.msra.mxu0 0.0
    %330 = vmatprep.subr.mxu0 0.0
    %331 = vmatpush1.xpose.msra.mxu0 0.0
    %332 = vmatprep.subr.mxu0 0.0
    %333 = vmatpush1.xpose.msra.mxu0 0.0
    %334 = vmatprep.subr.mxu0 0.0
    %335 = vmatpush1.xpose.msra.mxu0 0.0
    %336 = vmatprep.subr.mxu0 0.0
    %337 = vmatpush1.xpose.msra.mxu0 %v318
    %338 = vmatprep.subr.mxu0 0.0
    %339 = vmatpush1.xpose.msra.mxu0 %v316
    %340 = vmatprep.subr.mxu0 0.0
    %341 = vmatpush1.xpose.msra.mxu0 %v314
    %342 = vmatprep.subr.mxu0 0.0
    %343 = vmatpush1.xpose.msra.mxu0 %v312
    %344 = vmatprep.subr.mxu0 0.0
    %345 = vmatpush1.xpose.msra.mxu0 %v310
    %346 = vmatprep.subr.mxu0 0.0
    %347 = vmatpush1.xpose.msra.mxu0 %v308
    %348 = vmatprep.subr.mxu0 0.0
    %349 = vmatpush1.xpose.msra.mxu0 %v306
    %350 = vmatprep.subr.mxu0 0.0
    %351 = vmatpush1.xpose.msra.mxu0 %v304
    %352 = vmatprep.subr.mxu0 0.0
    %353 = vmatpush2.xpose.msra.mxu0 0.0
    %354 = vmatprep.subr.mxu0 0.0
    %355 = vmatpush2.xpose.msra.mxu0 0.0
    %356 = vmatprep.subr.mxu0 0.0
    %357 = vmatpush2.xpose.msra.mxu0 0.0
    %358 = vmatprep.subr.mxu0 0.0
    %359 = vmatpush2.xpose.msra.mxu0 0.0
    %360 = vmatprep.subr.mxu0 0.0
    %361 = vmatpush2.xpose.msra.mxu0 0.0
    %362 = vmatprep.subr.mxu0 0.0
    %363 = vmatpush2.xpose.msra.mxu0 0.0
    %364 = vmatprep.subr.mxu0 0.0
    %365 = vmatpush2.xpose.msra.mxu0 0.0
    %366 = vmatprep.subr.mxu0 0.0
    %367 = vmatpush2.xpose.msra.mxu0 0.0
    %368 = vmatprep.subr.mxu0 0.0
    %369 = vmatpush2.xpose.msra.mxu0 0.0
    %370 = vmatprep.subr.mxu0 0.0
    %371 = vmatpush2.xpose.msra.mxu0 0.0
    %372 = vmatprep.subr.mxu0 0.0
    %373 = vmatpush2.xpose.msra.mxu0 0.0
    %374 = vmatprep.subr.mxu0 0.0
    %375 = vmatpush2.xpose.msra.mxu0 0.0
    %376 = vmatprep.subr.mxu0 0.0
    %377 = vmatpush2.xpose.msra.mxu0 0.0
    %378 = vmatprep.subr.mxu0 0.0
    %379 = vmatpush2.xpose.msra.mxu0 0.0
    %380 = vmatprep.subr.mxu0 0.0
    %381 = vmatpush2.xpose.msra.mxu0 0.0
    %382 = vmatprep.subr.mxu0 0.0
    %383 = vmatpush2.xpose.msra.mxu0 0.0
    %384 = vmatprep.mubr.f32.mxu0 0.0
    %385 = vmatmul.mubr.f32.gmra.mxu0 %v299
    %v386 = vpop.f32.mrf.mxu0
    %v387 = vadd.f32 0.0, %v386
    %v388 = vpop.f32.mrf.mxu0
    %389 = vmatprep.mubr.f32.mxu0 0.0
    %390 = vmatmul.mubr.f32.gmra.mxu0 %v302
    %v391 = vpop.f32.mrf.mxu0
    %v392 = vadd.f32 0.0, %v391
    %v393 = vpop.f32.mrf.mxu0
    %394 = vdwg.mxu0
    %v395 = vld [vmem:[%s6] sm:$0xff]
    %v396 = vld [vmem:[%s6 + $0x8] sm:$0xff]
    %vm397 = vcmp.ne.f32.partialorder %v395, 0.0
    %vm398 = vcmp.ne.f32.partialorder %v396, 0.0
    %v399 = vsel %vm397, %v387, 0.0
    %v400 = vsel %vm398, %v392, 0.0
    %vm401 = vcmask 523264
    %v403 = vsel %vm401, %v399, 0
    %v406 = vsel %vm401, %v400, 0
    %408 = vmatprep.subr.mxu0 0.0
    %409 = vmatpush1.msra.mxu0 0.0
    %410 = vmatprep.subr.mxu0 0.0
    %411 = vmatpush1.msra.mxu0 0.0
    %412 = vmatprep.subr.mxu0 0.0
    %413 = vmatpush1.msra.mxu0 0.0
    %414 = vmatprep.subr.mxu0 0.0
    %415 = vmatpush1.msra.mxu0 0.0
    %416 = vmatprep.subr.mxu0 0.0
    %417 = vmatpush1.msra.mxu0 0.0
    %418 = vmatprep.subr.mxu0 0.0
    %419 = vmatpush1.msra.mxu0 0.0
    %420 = vmatprep.subr.mxu0 0.0
    %421 = vmatpush1.msra.mxu0 0.0
    %422 = vmatprep.subr.mxu0 0.0
    %423 = vmatpush1.msra.mxu0 0.0
    %424 = vmatprep.subr.mxu0 0.0
    %425 = vmatpush1.msra.mxu0 %v273
    %426 = vmatprep.subr.mxu0 0.0
    %427 = vmatpush1.msra.mxu0 %v272
    %428 = vmatprep.subr.mxu0 0.0
    %429 = vmatpush1.msra.mxu0 %v271
    %430 = vmatprep.subr.mxu0 0.0
    %431 = vmatpush1.msra.mxu0 %v270
    %432 = vmatprep.subr.mxu0 0.0
    %433 = vmatpush1.msra.mxu0 %v269
    %434 = vmatprep.subr.mxu0 0.0
    %435 = vmatpush1.msra.mxu0 %v268
    %436 = vmatprep.subr.mxu0 0.0
    %437 = vmatpush1.msra.mxu0 %v267
    %438 = vmatprep.subr.mxu0 0.0
    %439 = vmatpush1.msra.mxu0 %v266
    %440 = vmatprep.subr.mxu0 0.0
    %441 = vmatpush2.msra.mxu0 0.0
    %442 = vmatprep.subr.mxu0 0.0
    %443 = vmatpush2.msra.mxu0 0.0
    %444 = vmatprep.subr.mxu0 0.0
    %445 = vmatpush2.msra.mxu0 0.0
    %446 = vmatprep.subr.mxu0 0.0
    %447 = vmatpush2.msra.mxu0 0.0
    %448 = vmatprep.subr.mxu0 0.0
    %449 = vmatpush2.msra.mxu0 0.0
    %450 = vmatprep.subr.mxu0 0.0
    %451 = vmatpush2.msra.mxu0 0.0
    %452 = vmatprep.subr.mxu0 0.0
    %453 = vmatpush2.msra.mxu0 0.0
    %454 = vmatprep.subr.mxu0 0.0
    %455 = vmatpush2.msra.mxu0 0.0
    %456 = vmatprep.subr.mxu0 0.0
    %457 = vmatpush2.msra.mxu0 0.0
    %458 = vmatprep.subr.mxu0 0.0
    %459 = vmatpush2.msra.mxu0 0.0
    %460 = vmatprep.subr.mxu0 0.0
    %461 = vmatpush2.msra.mxu0 0.0
    %462 = vmatprep.subr.mxu0 0.0
    %463 = vmatpush2.msra.mxu0 0.0
    %464 = vmatprep.subr.mxu0 0.0
    %465 = vmatpush2.msra.mxu0 0.0
    %466 = vmatprep.subr.mxu0 0.0
    %467 = vmatpush2.msra.mxu0 0.0
    %468 = vmatprep.subr.mxu0 0.0
    %469 = vmatpush2.msra.mxu0 0.0
    %470 = vmatprep.subr.mxu0 0.0
    %471 = vmatpush2.msra.mxu0 0.0
    %472 = vmatprep.mubr.f32.mxu0 0.0
    %473 = vmatmul.mubr.f32.gmra.mxu0 %v403
    %v474 = vpop.f32.mrf.mxu0
    %v475 = vadd.f32 0.0, %v474
    %v476 = vpop.f32.mrf.mxu0
    %477 = vmatprep.mubr.f32.mxu0 0.0
    %478 = vmatmul.mubr.f32.gmra.mxu0 %v406
    %v479 = vpop.f32.mrf.mxu0
    %v480 = vadd.f32 0.0, %v479
    %v481 = vpop.f32.mrf.mxu0
    %482 = vdwg.mxu0
    %v483 = vrcp.pop %v475
    %v484 = vrcp.pop %v480
    %v485 = vmul.f32 %v475, %v483
    %v486 = vmul.f32 %v480, %v484
    %v487 = vsub.f32 2.0, %v485
    %v488 = vsub.f32 2.0, %v486
    %v489 = vmul.f32 %v483, %v487
    %v490 = vmul.f32 %v484, %v488
    %493 = vrot.lane.b32.xlu0 %v489, 96
    %v494 = vpop.permute.xlu0 %493
    %495 = vrot.lane.b32.xlu0 %v490, 96
    %v496 = vpop.permute.xlu0 %495
    %v499 = vmul.f32 %v475, %v494
    %v500 = vmul.f32 %v480, %v496
    %v501 = vld [vmem:[%s3] sm:$0xff]
    %v502 = vld [vmem:[%s3 + $0x8] sm:$0xff]
    %v503 = vld [vmem:[%s3 + $0x10] sm:$0xff]
    %v504 = vld [vmem:[%s3 + $0x18] sm:$0xff]
    %v505 = vld [vmem:[%s4] sm:$0x1]
    %v507 = vlaneseq
    %v508 = vshrl.u32 %v507, 7
    %v509 = vsub.s32 0, %v508
    %v510 = vrot.slane %v505, %v509
    %v513 = vsel %vm40, %v499, 0
    %v516 = vsel %vm40, %v500, 0
    %518 = vmatprep.subr.mxu0 0.0
    %519 = vmatpush1.msra.mxu0 0.0
    %520 = vmatprep.subr.mxu0 0.0
    %521 = vmatpush1.msra.mxu0 0.0
    %522 = vmatprep.subr.mxu0 0.0
    %523 = vmatpush1.msra.mxu0 0.0
    %524 = vmatprep.subr.mxu0 0.0
    %525 = vmatpush1.msra.mxu0 0.0
    %526 = vmatprep.subr.mxu0 0.0
    %527 = vmatpush1.msra.mxu0 0.0
    %528 = vmatprep.subr.mxu0 0.0
    %529 = vmatpush1.msra.mxu0 0.0
    %530 = vmatprep.subr.mxu0 0.0
    %531 = vmatpush1.msra.mxu0 0.0
    %532 = vmatprep.subr.mxu0 0.0
    %533 = vmatpush1.msra.mxu0 0.0
    %534 = vmatprep.subr.mxu0 0.0
    %535 = vmatpush1.msra.mxu0 0.0
    %536 = vmatprep.subr.mxu0 0.0
    %537 = vmatpush1.msra.mxu0 0.0
    %538 = vmatprep.subr.mxu0 0.0
    %539 = vmatpush1.msra.mxu0 0.0
    %540 = vmatprep.subr.mxu0 0.0
    %541 = vmatpush1.msra.mxu0 0.0
    %542 = vmatprep.subr.mxu0 0.0
    %543 = vmatpush1.msra.mxu0 %v504
    %544 = vmatprep.subr.mxu0 0.0
    %545 = vmatpush1.msra.mxu0 %v503
    %546 = vmatprep.subr.mxu0 0.0
    %547 = vmatpush1.msra.mxu0 %v502
    %548 = vmatprep.subr.mxu0 0.0
    %549 = vmatpush1.msra.mxu0 %v501
    %550 = vmatprep.subr.mxu0 0.0
    %551 = vmatpush2.msra.mxu0 0.0
    %552 = vmatprep.subr.mxu0 0.0
    %553 = vmatpush2.msra.mxu0 0.0
    %554 = vmatprep.subr.mxu0 0.0
    %555 = vmatpush2.msra.mxu0 0.0
    %556 = vmatprep.subr.mxu0 0.0
    %557 = vmatpush2.msra.mxu0 0.0
    %558 = vmatprep.subr.mxu0 0.0
    %559 = vmatpush2.msra.mxu0 0.0
    %560 = vmatprep.subr.mxu0 0.0
    %561 = vmatpush2.msra.mxu0 0.0
    %562 = vmatprep.subr.mxu0 0.0
    %563 = vmatpush2.msra.mxu0 0.0
    %564 = vmatprep.subr.mxu0 0.0
    %565 = vmatpush2.msra.mxu0 0.0
    %566 = vmatprep.subr.mxu0 0.0
    %567 = vmatpush2.msra.mxu0 0.0
    %568 = vmatprep.subr.mxu0 0.0
    %569 = vmatpush2.msra.mxu0 0.0
    %570 = vmatprep.subr.mxu0 0.0
    %571 = vmatpush2.msra.mxu0 0.0
    %572 = vmatprep.subr.mxu0 0.0
    %573 = vmatpush2.msra.mxu0 0.0
    %574 = vmatprep.subr.mxu0 0.0
    %575 = vmatpush2.msra.mxu0 0.0
    %576 = vmatprep.subr.mxu0 0.0
    %577 = vmatpush2.msra.mxu0 0.0
    %578 = vmatprep.subr.mxu0 0.0
    %579 = vmatpush2.msra.mxu0 0.0
    %580 = vmatprep.subr.mxu0 0.0
    %581 = vmatpush2.msra.mxu0 0.0
    %582 = vmatprep.mubr.f32.mxu0 0.0
    %583 = vmatmul.mubr.f32.gmra.mxu0 %v513
    %v584 = vpop.f32.mrf.mxu0
    %v585 = vadd.f32 %v510, %v584
    %v586 = vpop.f32.mrf.mxu0
    %587 = vmatprep.mubr.f32.mxu0 0.0
    %588 = vmatmul.mubr.f32.gmra.mxu0 %v516
    %v589 = vpop.f32.mrf.mxu0
    %v590 = vadd.f32 %v510, %v589
    %v591 = vpop.f32.mrf.mxu0
    %592 = vdwg.mxu0
    %593 = vst.msk [vmem:[#allocation2] sm:$0xff] %vm40, %v585
    %594 = vst.msk [vmem:[#allocation2 + $0x8] sm:$0xff] %vm40, %v590
    // Predicated region
    $region30: #{linear_multihead_attention.1} parent=1 // pred_check
      _
    $region31: #{linear_multihead_attention.1} parent=1 // pred_check_branch
      %596 = sbr.rel (0) target = $region33
    $region32: #{linear_multihead_attention.1} parent=1 // pred_region
      %s598 = ssub.s32 256, 256
      %599 = vsyncadd [#allocation3], %s598
      %s600 = sshll.u32 [#allocation2], 4
      %s601 = int_to_ptr.vmem [resolvable:$true] %s600
      %606 = dma.vmem_to_hbm [thread:$0]  %s601, 256, %s7, [#allocation3], 128, 128, 8
    $region33: #{linear_multihead_attention.1} parent=1 // pred_fallthru
      _
    // Predicated region
    $region34: #{linear_multihead_attention.1} parent=1 // pred_check
      _
    $region35: #{linear_multihead_attention.1} parent=1 // pred_check_branch
      %608 = sbr.rel (0) target = $region37
    $region36: #{linear_multihead_attention.1} parent=1 // pred_region
      %609 = dma.done [#allocation3], 256
    $region37: #{linear_multihead_attention.1} parent=1 // pred_fallthru
      _
    %610 = vsyncpa [#allocation3], 1

</llo_original>
